<compile_context>
chip_gen: v7x
topology: tpu7x:2x2x1
jax: 0.10.0
libtpu: 0.0.40
codegen_flags: <defaults>
</compile_context>

<pallas_src>
import functools
import math

import jax
import jax.numpy as jnp
from jax.experimental import pallas as pl
from jax.experimental.pallas import tpu as pltpu

_INV_SQRT2 = 1.0 / math.sqrt(2.0)
_VMEM_BUDGET = 24 * 1024 * 1024   # conservative: fits default scoped VMEM on all gens


def _round_up(x, m):
    return (x + m - 1) // m * m


def _choose_tm(M, per_row_bytes, fixed_bytes, cap=512):
    """Pick a row tile: largest power-of-two <= cap whose double-buffered
    working set (per_row_bytes * tm + fixed_bytes) fits the VMEM budget.
    Returns (tm, padded_M). If M fits in one tile, use the full dim (always a
    legal block shape) and no padding."""
    avail = max(_VMEM_BUDGET - fixed_bytes, per_row_bytes * 8)
    tm = cap
    while tm > 8 and tm * per_row_bytes > avail:
        tm //= 2
    if M <= tm:
        return M, M
    return tm, _round_up(M, tm)


def _pad_rows(x, m_pad):
    m = x.shape[0]
    if m == m_pad:
        return x
    return jnp.pad(x, ((0, m_pad - m), (0, 0)))


# ----------------------------- Pallas kernels ------------------------------

def _matmul_bias_kernel(x_ref, w_ref, b_ref, o_ref, *, activation):
    # Whole-K dot per grid step, f32 accumulation on the MXU.
    acc = jnp.dot(x_ref[...], w_ref[...], preferred_element_type=jnp.float32)
    acc = acc + b_ref[...].astype(jnp.float32)
    if activation == "gelu":
        # BERT uses the exact (erf) GELU.
        # TODO(synk): on v5e consider tanh-approx GELU (EUP slot) if the erf
        # polynomial epilogue shows up as VALU-bound.
        acc = 0.5 * acc * (1.0 + jax.lax.erf(acc * _INV_SQRT2))
    o_ref[...] = acc.astype(o_ref.dtype)


def matmul_bias(x, w, b, activation="none", out_dtype=jnp.bfloat16, tm_cap=512):
    """o = activation(x @ w + b); x:(M,K) bf16, w:(K,N) bf16 resident, b:(N,)."""
    M, K = x.shape
    K2, N = w.shape
    assert K == K2 and b.shape == (N,)
    ob = jnp.dtype(out_dtype).itemsize
    # double-buffered x row + out row, plus an f32 epilogue margin
    per_row = 2 * (K * x.dtype.itemsize + N * ob) + 4 * N
    fixed = 2 * K * N * w.dtype.itemsize          # resident weight, 2 buffers
    tm, m_pad = _choose_tm(M, per_row, fixed, tm_cap)
    xp = _pad_rows(x, m_pad)
    b2 = b.reshape(1, N).astype(jnp.float32)

    out = pl.pallas_call(
        functools.partial(_matmul_bias_kernel, activation=activation),
        out_shape=jax.ShapeDtypeStruct((m_pad, N), out_dtype),
        grid=(m_pad // tm,),
        in_specs=[
            pl.BlockSpec((tm, K), lambda i: (i, 0)),
            pl.BlockSpec((K, N), lambda i: (0, 0)),   # weight stays resident
            pl.BlockSpec((1, N), lambda i: (0, 0)),
        ],
        out_specs=pl.BlockSpec((tm, N), lambda i: (i, 0)),
        compiler_params=pltpu.CompilerParams(
            dimension_semantics=("parallel",)),
    )(xp, w, b2)
    return out if m_pad == M else out[:M]


def _matmul_bias_res_ln_kernel(x_ref, w_ref, b_ref, r_ref, g_ref, bb_ref,
                               o_ref, *, eps):
    # fused: (x @ w + b) + residual, then LayerNorm over the last dim (f32)
    y = jnp.dot(x_ref[...], w_ref[...], preferred_element_type=jnp.float32)
    y = y + b_ref[...].astype(jnp.float32) + r_ref[...].astype(jnp.float32)
    mean = jnp.mean(y, axis=-1, keepdims=True)
    var = jnp.mean(jnp.square(y - mean), axis=-1, keepdims=True)
    inv = jax.lax.rsqrt(var + eps)
    o_ref[...] = ((y - mean) * inv * g_ref[...].astype(jnp.float32)
                  + bb_ref[...].astype(jnp.float32)).astype(o_ref.dtype)


def matmul_bias_res_ln(x, w, b, residual, gamma, beta, eps=1e-12,
                       out_dtype=jnp.bfloat16, tm_cap=512):
    """o = LayerNorm((x @ w + b) + residual); N kept whole (LN over last dim)."""
    M, K = x.shape
    K2, N = w.shape
    assert K == K2 and residual.shape == (M, N)
    # double-buffered x / residual / out rows + f32 LN working margin
    per_row = 2 * (K * x.dtype.itemsize + N * residual.dtype.itemsize
                   + N * jnp.dtype(out_dtype).itemsize) + 8 * N
    fixed = 2 * K * N * w.dtype.itemsize
    tm, m_pad = _choose_tm(M, per_row, fixed, tm_cap)
    xp = _pad_rows(x, m_pad)
    rp = _pad_rows(residual, m_pad)
    b2 = b.reshape(1, N).astype(jnp.float32)
    g2 = gamma.reshape(1, N).astype(jnp.float32)
    bb2 = beta.reshape(1, N).astype(jnp.float32)

    out = pl.pallas_call(
        functools.partial(_matmul_bias_res_ln_kernel, eps=eps),
        out_shape=jax.ShapeDtypeStruct((m_pad, N), out_dtype),
        grid=(m_pad // tm,),
        in_specs=[
            pl.BlockSpec((tm, K), lambda i: (i, 0)),
            pl.BlockSpec((K, N), lambda i: (0, 0)),   # resident weight
            pl.BlockSpec((1, N), lambda i: (0, 0)),
            pl.BlockSpec((tm, N), lambda i: (i, 0)),
            pl.BlockSpec((1, N), lambda i: (0, 0)),
            pl.BlockSpec((1, N), lambda i: (0, 0)),
        ],
        out_specs=pl.BlockSpec((tm, N), lambda i: (i, 0)),
        compiler_params=pltpu.CompilerParams(
            dimension_semantics=("parallel",)),
    )(xp, w, b2, rp, g2, bb2)
    return out if m_pad == M else out[:M]


def _emb_ln_kernel(word_ref, tok_ref, pos_ref, g_ref, b_ref, o_ref, *, eps):
    # fused word + position + token-type add, then LayerNorm (all f32 math)
    x = (word_ref[...].astype(jnp.float32) + tok_ref[...].astype(jnp.float32)
         + pos_ref[...].astype(jnp.float32))
    mean = jnp.mean(x, axis=-1, keepdims=True)
    var = jnp.mean(jnp.square(x - mean), axis=-1, keepdims=True)
    inv = jax.lax.rsqrt(var + eps)
    o_ref[...] = ((x - mean) * inv * g_ref[...] + b_ref[...]).astype(o_ref.dtype)


def emb_add_layernorm(word, tok, pos, gamma, beta, eps=1e-12,
                      out_dtype=jnp.bfloat16):
    """LayerNorm(word + pos + tok); word/tok:(B,S,H), pos:(S,H)."""
    B, S, H = word.shape
    g2 = gamma.reshape(1, H).astype(jnp.float32)
    b2 = beta.reshape(1, H).astype(jnp.float32)
    return pl.pallas_call(
        functools.partial(_emb_ln_kernel, eps=eps),
        out_shape=jax.ShapeDtypeStruct((B, S, H), out_dtype),
        grid=(B,),
        in_specs=[
            pl.BlockSpec((None, S, H), lambda b: (b, 0, 0)),
            pl.BlockSpec((None, S, H), lambda b: (b, 0, 0)),
            pl.BlockSpec((S, H), lambda b: (0, 0)),
            pl.BlockSpec((1, H), lambda b: (0, 0)),
            pl.BlockSpec((1, H), lambda b: (0, 0)),
        ],
        out_specs=pl.BlockSpec((None, S, H), lambda b: (b, 0, 0)),
        compiler_params=pltpu.CompilerParams(
            dimension_semantics=("parallel",)),
    )(word, tok, pos, g2, b2)


def _attention_kernel(qkv_ref, m_ref, o_ref, *, n_heads, d_head, hidden):
    # Q columns of the fused QKV weight were pre-scaled by 1/sqrt(d_head) at
    # init, so no per-score scaling is needed here.
    qkv = qkv_ref[...]                              # (S, 3H) bf16
    mask = m_ref[...].astype(jnp.float32)           # (1, S) additive mask
    for h in range(n_heads):
        q = qkv[:, h * d_head:(h + 1) * d_head]
        k = qkv[:, hidden + h * d_head:hidden + (h + 1) * d_head]
        v = qkv[:, 2 * hidden + h * d_head:2 * hidden + (h + 1) * d_head]
        # QK^T via dot_general contracting the last dims (no explicit .T).
        s = jax.lax.dot_general(
            q, k, dimension_numbers=(((1,), (1,)), ((), ())),
            preferred_element_type=jnp.float32) + mask
        s = s - jnp.max(s, axis=-1, keepdims=True)
        p = jnp.exp(s)
        denom = jnp.sum(p, axis=-1, keepdims=True)
        ctx = jnp.dot(p.astype(qkv.dtype), v,
                      preferred_element_type=jnp.float32)        # (S, Dh)
        # normalize the small (S,Dh) context instead of the (S,S) probs
        ctx = ctx * pl.reciprocal(denom, approx=True)
        o_ref[:, h * d_head:(h + 1) * d_head] = ctx.astype(o_ref.dtype)


def attention(qkv, ext_mask, n_heads, d_head):
    """qkv:(B,S,3H) bf16 (fused Q|K|V, Q pre-scaled), ext_mask:(B,1,S) -> (B,S,H)."""
    B, S, three_h = qkv.shape
    H = n_heads * d_head
    assert three_h == 3 * H
    # TODO(synk): for long sequences, tile the KV dimension (flash-style online
    # softmax) and grid over (B, heads) instead of materializing the full (S,S)
    # score matrix per head within a single (B,) grid step.
    return pl.pallas_call(
        functools.partial(_attention_kernel, n_heads=n_heads,
                          d_head=d_head, hidden=H),
        out_shape=jax.ShapeDtypeStruct((B, S, H), jnp.bfloat16),
        grid=(B,),
        in_specs=[
            pl.BlockSpec((None, S, three_h), lambda b: (b, 0, 0)),
            pl.BlockSpec((None, 1, S), lambda b: (b, 0, 0)),
        ],
        out_specs=pl.BlockSpec((None, S, H), lambda b: (b, 0, 0)),
        compiler_params=pltpu.CompilerParams(
            dimension_semantics=("parallel",)),
    )(qkv, ext_mask)


# ----------------------------- Parameter init ------------------------------

def init_params(key, cfg):
    H = cfg["hidden"]
    I = cfg["intermediate"]
    Dh = H // cfg["heads"]
    qk_scale = 1.0 / math.sqrt(Dh)
    std = 0.02

    def normal(k, shape):
        return jax.random.normal(k, shape, dtype=jnp.float32) * std

    keys = iter(jax.random.split(key, 8 + cfg["layers"] * 8))

    head_pad = ((cfg["out_fea"] + 127) // 128) * 128   # lane-dense head output
    lin_w = normal(next(keys), (H, cfg["out_fea"]))
    lin_w_pad = jnp.zeros((H, head_pad), jnp.float32).at[:, :cfg["out_fea"]].set(lin_w)

    params = {
        "word_emb": normal(next(keys), (cfg["vocab"], H)),
        "pos_emb": normal(next(keys), (cfg["max_pos"], H)),
        "type_emb": normal(next(keys), (cfg["type_vocab"], H)),
        "emb_ln_g": jnp.ones((H,), jnp.float32),
        "emb_ln_b": jnp.zeros((H,), jnp.float32),
        "lin_w": lin_w_pad.astype(jnp.bfloat16),
        "lin_b": jnp.zeros((head_pad,), jnp.float32),
        "head_pad": head_pad,
        "layers": [],
    }
    for _ in range(cfg["layers"]):
        wq = normal(next(keys), (H, H))
        wk = normal(next(keys), (H, H))
        wv = normal(next(keys), (H, H))
        bq = jnp.zeros((H,), jnp.float32)
        layer = {
            # fused QKV projection weight (H, 3H), bf16 for the MXU.
            # 1/sqrt(Dh) is folded into the Q columns (and Q bias) so the
            # attention kernel never multiplies the (S,S) score matrix.
            "w_qkv": jnp.concatenate([wq * qk_scale, wk, wv],
                                     axis=1).astype(jnp.bfloat16),
            "b_qkv": jnp.concatenate([bq * qk_scale,
                                      jnp.zeros((2 * H,), jnp.float32)]),
            "wo": normal(next(keys), (H, H)).astype(jnp.bfloat16),
            "bo": jnp.zeros((H,), jnp.float32),
            "ln1_g": jnp.ones((H,), jnp.float32),
            "ln1_b": jnp.zeros((H,), jnp.float32),
            "w1": normal(next(keys), (H, I)).astype(jnp.bfloat16),
            "b1": jnp.zeros((I,), jnp.float32),
            "w2": normal(next(keys), (I, H)).astype(jnp.bfloat16),
            "b2": jnp.zeros((H,), jnp.float32),
            "ln2_g": jnp.ones((H,), jnp.float32),
            "ln2_b": jnp.zeros((H,), jnp.float32),
        }
        params["layers"].append(layer)
    return params


# ------------------------------- Forward pass -------------------------------

def pure_model_forward(params, input_ids, token_type_ids, attention_mask, cfg):
    B, S = input_ids.shape
    H = cfg["hidden"]
    nH = cfg["heads"]
    Dh = H // nH
    M = B * S

    # --- BertEmbeddings: gathers are glue, add + LayerNorm fused in Pallas ---
    word = jnp.take(params["word_emb"], input_ids, axis=0)            # (B,S,H)
    tok = jnp.take(params["type_emb"], token_type_ids, axis=0)        # (B,S,H)
    pos = params["pos_emb"][:S]                                       # (S,H)
    h = emb_add_layernorm(word, tok, pos,
                          params["emb_ln_g"], params["emb_ln_b"])     # (B,S,H) bf16
    h = h.reshape(M, H)

    # --- extended attention mask: (1 - m) * -10000, shape (B, 1, S) ---
    ext_mask = ((1.0 - attention_mask.astype(jnp.float32)) * -10000.0)
    ext_mask = ext_mask.reshape(B, 1, S)

    # --- Transformer encoder layers ---
    for layer in params["layers"]:
        # fused Q|K|V projection: one matmul, weight resident in VMEM
        qkv = matmul_bias(h, layer["w_qkv"], layer["b_qkv"])          # (M, 3H)
        ctx = attention(qkv.reshape(B, S, 3 * H), ext_mask, nH, Dh)   # (B,S,H)
        ctx = ctx.reshape(M, H)

        # attention output projection with fused residual + LayerNorm epilogue
        h = matmul_bias_res_ln(ctx, layer["wo"], layer["bo"], h,
                               layer["ln1_g"], layer["ln1_b"])

        # FFN: GELU fused into the first matmul, residual+LN fused into second
        inter = matmul_bias(h, layer["w1"], layer["b1"], activation="gelu")
        h = matmul_bias_res_ln(inter, layer["w2"], layer["b2"], h,
                               layer["ln2_g"], layer["ln2_b"])

    last_hidden = h.reshape(B, S, H)
    # PureModel.forward: token_emb / cls_emb are computed but unused.
    token_emb = last_hidden[:, 1:, :]   # noqa: F841 (kept for parity with torch code)
    cls_emb = last_hidden[:, 0, :]      # noqa: F841

    # lane-padded linear head (N=128 multiple), sliced back to out_fea
    out_pad = matmul_bias(h, params["lin_w"], params["lin_b"],
                          out_dtype=jnp.float32)                      # (M, pad)
    out = out_pad[:, :cfg["out_fea"]].reshape(B, S, cfg["out_fea"])
    return out


# ---------------------------------- Main ------------------------------------

if __name__ == "__main__":
    cfg = dict(vocab=100, hidden=32, layers=2, heads=2, intermediate=64,
               max_pos=16, type_vocab=2, out_fea=1)

    B, S = 2, 8
    key = jax.random.PRNGKey(0)
    k_param, k_ids, k_type = jax.random.split(key, 3)

    params = init_params(k_param, cfg)

    input_ids = jax.random.randint(k_ids, (B, S), 0, cfg["vocab"], dtype=jnp.int32)
    token_type_ids = jax.random.randint(k_type, (B, S), 0, cfg["type_vocab"],
                                        dtype=jnp.int32)
    # last two tokens of batch 1 are padding
    attention_mask = jnp.array([[1] * S, [1] * (S - 2) + [0, 0]], dtype=jnp.int32)

    out = pure_model_forward(params, input_ids, token_type_ids, attention_mask, cfg)
    out = jax.block_until_ready(out)
    assert out.shape == (B, S, cfg["out_fea"])
    assert bool(jnp.all(jnp.isfinite(out)))
    print("KERNEL_OK")
</pallas_src>

<mosaic_0001>
module attributes {stable_mosaic.version = 11 : i64} {
  func.func @_emb_ln_kernel(%arg0: i32, %arg1: memref<1x8x32xf32, #tpu.memory_space<vmem>>, %arg2: memref<1x8x32xf32, #tpu.memory_space<vmem>>, %arg3: memref<8x32xf32, #tpu.memory_space<vmem>>, %arg4: memref<1x32xf32, #tpu.memory_space<vmem>>, %arg5: memref<1x32xf32, #tpu.memory_space<vmem>>, %arg6: memref<1x8x32xbf16, #tpu.memory_space<vmem>>) attributes {dimension_semantics = [#tpu.dimension_semantics<parallel>], iteration_bounds = array<i64: 2>, scalar_prefetch = 0 : i64, scratch_operands = 0 : i64, tpu.core_type = #tpu.core_type<tc>, window_params = [{transform_indices = @transform_0, window_bounds = array<i64: 1, 8, 32>}, {transform_indices = @transform_1, window_bounds = array<i64: 1, 8, 32>}, {pipeline_mode = #tpu.pipeline_mode<synchronous>, transform_indices = @transform_2, window_bounds = array<i64: 8, 32>}, {pipeline_mode = #tpu.pipeline_mode<synchronous>, transform_indices = @transform_3, window_bounds = array<i64: 1, 32>}, {pipeline_mode = #tpu.pipeline_mode<synchronous>, transform_indices = @transform_4, window_bounds = array<i64: 1, 32>}, {transform_indices = @transform_5, window_bounds = array<i64: 1, 8, 32>}]} {
    %c0 = arith.constant 0 : index
    %c0_0 = arith.constant 0 : index
    %c0_1 = arith.constant 0 : index
    %0 = vector.load %arg1[%c0, %c0_0, %c0_1] : memref<1x8x32xf32, #tpu.memory_space<vmem>>, vector<1x8x32xf32>
    %1 = vector.shape_cast %0 : vector<1x8x32xf32> to vector<8x32xf32>
    %c0_2 = arith.constant 0 : index
    %c0_3 = arith.constant 0 : index
    %c0_4 = arith.constant 0 : index
    %2 = vector.load %arg2[%c0_2, %c0_3, %c0_4] : memref<1x8x32xf32, #tpu.memory_space<vmem>>, vector<1x8x32xf32>
    %3 = vector.shape_cast %2 : vector<1x8x32xf32> to vector<8x32xf32>
    %4 = arith.addf %1, %3 : vector<8x32xf32>
    %c0_5 = arith.constant 0 : index
    %c0_6 = arith.constant 0 : index
    %5 = vector.load %arg3[%c0_5, %c0_6] : memref<8x32xf32, #tpu.memory_space<vmem>>, vector<8x32xf32>
    %6 = arith.addf %4, %5 : vector<8x32xf32>
    %cst = arith.constant dense<0.000000e+00> : vector<8xf32>
    %7 = vector.multi_reduction <add>, %6, %cst [1] : vector<8x32xf32> to vector<8xf32>
    %8 = vector.shape_cast %7 : vector<8xf32> to vector<8x1xf32>
    %cst_7 = arith.constant 3.200000e+01 : f32
    %9 = vector.broadcast %cst_7 : f32 to vector<8x1xf32>
    %10 = arith.divf %8, %9 : vector<8x1xf32>
    %11 = vector.broadcast %10 : vector<8x1xf32> to vector<8x32xf32>
    %12 = arith.subf %6, %11 : vector<8x32xf32>
    %13 = arith.mulf %12, %12 : vector<8x32xf32>
    %cst_8 = arith.constant dense<0.000000e+00> : vector<8xf32>
    %14 = vector.multi_reduction <add>, %13, %cst_8 [1] : vector<8x32xf32> to vector<8xf32>
    %15 = vector.shape_cast %14 : vector<8xf32> to vector<8x1xf32>
    %cst_9 = arith.constant 3.200000e+01 : f32
    %16 = vector.broadcast %cst_9 : f32 to vector<8x1xf32>
    %17 = arith.divf %15, %16 : vector<8x1xf32>
    %cst_10 = arith.constant 9.99999996E-13 : f32
    %18 = vector.broadcast %cst_10 : f32 to vector<8x1xf32>
    %19 = arith.addf %17, %18 : vector<8x1xf32>
    %20 = math.rsqrt %19 : vector<8x1xf32>
    %21 = vector.broadcast %10 : vector<8x1xf32> to vector<8x32xf32>
    %22 = arith.subf %6, %21 : vector<8x32xf32>
    %23 = vector.broadcast %20 : vector<8x1xf32> to vector<8x32xf32>
    %24 = arith.mulf %22, %23 : vector<8x32xf32>
    %c0_11 = arith.constant 0 : index
    %c0_12 = arith.constant 0 : index
    %25 = vector.load %arg4[%c0_11, %c0_12] : memref<1x32xf32, #tpu.memory_space<vmem>>, vector<1x32xf32>
    %26 = vector.broadcast %25 : vector<1x32xf32> to vector<8x32xf32>
    %27 = arith.mulf %24, %26 : vector<8x32xf32>
    %c0_13 = arith.constant 0 : index
    %c0_14 = arith.constant 0 : index
    %28 = vector.load %arg5[%c0_13, %c0_14] : memref<1x32xf32, #tpu.memory_space<vmem>>, vector<1x32xf32>
    %29 = vector.broadcast %28 : vector<1x32xf32> to vector<8x32xf32>
    %30 = arith.addf %27, %29 : vector<8x32xf32>
    %31 = arith.truncf %30 : vector<8x32xf32> to vector<8x32xbf16>
    %c0_15 = arith.constant 0 : index
    %c0_16 = arith.constant 0 : index
    %c0_17 = arith.constant 0 : index
    %32 = vector.load %arg6[%c0_15, %c0_16, %c0_17] : memref<1x8x32xbf16, #tpu.memory_space<vmem>>, vector<1x8x32xbf16>
    %33 = vector.shape_cast %32 : vector<1x8x32xbf16> to vector<8x32xbf16>
    %34 = vector.shape_cast %31 : vector<8x32xbf16> to vector<1x8x32xbf16>
    tpu.vector_store %arg6[%c0_15, %c0_16, %c0_17], %34 {strides = array<i32>} : memref<1x8x32xbf16, #tpu.memory_space<vmem>>, vector<1x8x32xbf16>,
    return
  }
  func.func @transform_0(%arg0: i32) -> (i32, i32, i32) {
    %c0_i32 = arith.constant 0 : i32
    %c0_i32_0 = arith.constant 0 : i32
    %c0_i32_1 = arith.constant 0 : i32
    return %arg0, %c0_i32, %c0_i32_0 : i32, i32, i32
  }
  func.func @transform_1(%arg0: i32) -> (i32, i32, i32) {
    %c0_i32 = arith.constant 0 : i32
    %c0_i32_0 = arith.constant 0 : i32
    %c0_i32_1 = arith.constant 0 : i32
    return %arg0, %c0_i32, %c0_i32_0 : i32, i32, i32
  }
  func.func @transform_2(%arg0: i32) -> (i32, i32) {
    %c0_i32 = arith.constant 0 : i32
    %c0_i32_0 = arith.constant 0 : i32
    %c0_i32_1 = arith.constant 0 : i32
    return %c0_i32, %c0_i32_0 : i32, i32
  }
  func.func @transform_3(%arg0: i32) -> (i32, i32) {
    %c0_i32 = arith.constant 0 : i32
    %c0_i32_0 = arith.constant 0 : i32
    %c0_i32_1 = arith.constant 0 : i32
    return %c0_i32, %c0_i32_0 : i32, i32
  }
  func.func @transform_4(%arg0: i32) -> (i32, i32) {
    %c0_i32 = arith.constant 0 : i32
    %c0_i32_0 = arith.constant 0 : i32
    %c0_i32_1 = arith.constant 0 : i32
    return %c0_i32, %c0_i32_0 : i32, i32
  }
  func.func @transform_5(%arg0: i32) -> (i32, i32, i32) {
    %c0_i32 = arith.constant 0 : i32
    %c0_i32_0 = arith.constant 0 : i32
    %c0_i32_1 = arith.constant 0 : i32
    return %arg0, %c0_i32, %c0_i32_0 : i32, i32, i32
  }
}

</mosaic_0001>

<llo_original>
// kernel: tpu_custom_call.1
$region0: #{tpu_custom_call.1}
  #allocation0 [shape = 'u32[]', space=smem, size = 0x4, offset = 0x4, fixed_abs, tag = 'smem constant byte address 0x4 - core index']
  #allocation1 [shape = 'u32[144,128]{1,0:T(1,128)}', space=vmem, size = 0x12000, scoped, tag = 'internal scratch']
  %s0 = inlined_call_operand.hbm [shape: f32[2,8,32], index: 0, kind: input, shape index: {}]
  %s1 = inlined_call_operand.hbm [shape: f32[2,8,32], index: 1, kind: input, shape index: {}]
  %s2 = inlined_call_operand.hbm [shape: f32[8,32], index: 2, kind: input, shape index: {}]
  %s3 = inlined_call_operand.vmem [shape: f32[1,32], index: 3, kind: input, shape index: {}]
  %s4 = inlined_call_operand.vmem [shape: f32[1,32], index: 4, kind: input, shape index: {}]
  %s5 = inlined_call_operand.hbm [shape: bf16[2,8,32], index: 5, kind: output, shape index: {}]
  %s6 = sld [smem:[#allocation0]]
  $region65: #{tpu_custom_call.1} parent=0
    _
  %s8 = ssub.s32 1, %s6
  %s9 = scalar_select 0, %s8, %s6
  $region1: #{tpu_custom_call.1} parent=0
    #allocation2 [shape = 'u8[8192]{0}', space=vmem, size = 0x2000, scoped, tag = 'input window, operand 0']
    #allocation3 [shape = 's32[2]{0}', space=sflag, size = 0x8, scoped, tag = 'scoped memory for tpu_custom_call.1']
    #allocation4 [shape = 's32[2]{0}', space=sflag, size = 0x8, scoped, tag = 'scoped memory for tpu_custom_call.1']
    #allocation5 [shape = 'u8[8192]{0}', space=vmem, size = 0x2000, scoped, tag = 'input window, operand 1']
    #allocation6 [shape = 's32[2]{0}', space=sflag, size = 0x8, scoped, tag = 'scoped memory for tpu_custom_call.1']
    #allocation7 [shape = 'u8[4096]{0}', space=vmem, size = 0x1000, scoped, tag = 'input window, operand 2, single buffered']
    #allocation8 [shape = 'u8[4096]{0}', space=vmem, size = 0x1000, scoped, tag = 'output window, operand 0']
    %10 = vsyncpa [#allocation3], 0
    %s11 = scalar_lea.sflag [#allocation3], 1
    %12 = vsyncpa %s11, 0
    %13 = vsyncpa [#allocation6], 0
    %s14 = scalar_lea.sflag [#allocation6], 1
    %15 = vsyncpa %s14, 0
    %16 = vsyncpa [#allocation4], 0
    %s17 = scalar_lea.sflag [#allocation4], 1
    %18 = vsyncpa %s17, 0
    loop: start=0, step=1, limit=4
    $region2: #{tpu_custom_call.1} parent=1 // loop_pre_header
      _
    $region3: #{tpu_custom_call.1} parent=1 // loop_header
      %s20 = sphi 0, %s24
      %p21 = scmp.ge.s32.totalorder %s20, 4
      %s30 = sphi 0, %s32
      %s33 = sphi 0, %s30
      %s34 = sphi 0, %s33
      %s50 = sphi 0, %s34
      %s56 = sphi 0, %s58
      %s59 = sphi 0, %s56
      %s60 = sphi 0, %s59
      %s76 = sphi 0, %s60
      %s80 = sphi 0, %s80
      %s82 = sphi 0, %s80
      %s83 = sphi 0, %s82
      %s97 = sphi 0, %s83
      %s101 = sphi 0, %s101
      %s103 = sphi 0, %s101
      %s104 = sphi 0, %s103
      %s118 = sphi 0, %s104
      %s122 = sphi 0, %s122
      %s124 = sphi 0, %s122
      %s125 = sphi 0, %s124
      %s139 = sphi 0, %s125
      %s145 = sphi 0, %s147
      %s148 = sphi 0, %s145
      %s149 = sphi 0, %s148
      %s165 = sphi 0, %s149
    $region4: #{tpu_custom_call.1} parent=1 // loop_header_branch
      %23 = sbr.rel (%p21) target = $region8
    $region5: #{tpu_custom_call.1} parent=1 // loop_body
      %s25 = ssub.s32 %s20, 1
      %s26 = ssub.s32 %s20, 2
      %s27 = sadd.s32 %s20, 1
      %s28 = ssub.s32 %s20, %s27
      %p29 = scmp.eq.s32.totalorder %s28, 0
      %s31 = sadd.s32 %s30, 1
      %s32 = scalar_select %p29, %s30, %s31
      %p35 = pneg %p29
      %p36 = scmp.eq.s32.totalorder %s20, 1
      %p37 = por %p35, %p36
      %p38 = scmp.ne.s32.totalorder %s30, %s33
      %p39 = scmp.eq.s32.totalorder %s20, 0
      %p40 = por %p38, %p39
      %p41 = scmp.ne.s32.totalorder %s30, %s33
      %p42 = scmp.eq.s32.totalorder %s25, 1
      %p43 = por %p41, %p42
      %p44 = scmp.ne.s32.totalorder %s33, %s34
      %p45 = scmp.eq.s32.totalorder %s25, 0
      %p46 = por %p44, %p45
      %p47 = scmp.ne.s32.totalorder %s33, %s34
      %p48 = scmp.eq.s32.totalorder %s26, 1
      %p49 = por %p47, %p48
      %p51 = scmp.ne.s32.totalorder %s34, %s50
      %p52 = scmp.eq.s32.totalorder %s26, 0
      %p53 = por %p51, %p52
      %s54 = ssub.s32 %s20, %s27
      %p55 = scmp.eq.s32.totalorder %s54, 0
      %s57 = sadd.s32 %s56, 1
      %s58 = scalar_select %p55, %s56, %s57
      %p61 = pneg %p55
      %p62 = scmp.eq.s32.totalorder %s20, 1
      %p63 = por %p61, %p62
      %p64 = scmp.ne.s32.totalorder %s56, %s59
      %p65 = scmp.eq.s32.totalorder %s20, 0
      %p66 = por %p64, %p65
      %p67 = scmp.ne.s32.totalorder %s56, %s59
      %p68 = scmp.eq.s32.totalorder %s25, 1
      %p69 = por %p67, %p68
      %p70 = scmp.ne.s32.totalorder %s59, %s60
      %p71 = scmp.eq.s32.totalorder %s25, 0
      %p72 = por %p70, %p71
      %p73 = scmp.ne.s32.totalorder %s59, %s60
      %p74 = scmp.eq.s32.totalorder %s26, 1
      %p75 = por %p73, %p74
      %p77 = scmp.ne.s32.totalorder %s60, %s76
      %p78 = scmp.eq.s32.totalorder %s26, 0
      %p79 = por %p77, %p78
      %s81 = sadd.s32 %s80, 1
      %p84 = scmp.eq.s32.totalorder %s20, 1
      %p85 = scmp.ne.s32.totalorder %s80, %s82
      %p86 = scmp.eq.s32.totalorder %s20, 0
      %p87 = por %p85, %p86
      %p88 = scmp.ne.s32.totalorder %s80, %s82
      %p89 = scmp.eq.s32.totalorder %s25, 1
      %p90 = por %p88, %p89
      %p91 = scmp.ne.s32.totalorder %s82, %s83
      %p92 = scmp.eq.s32.totalorder %s25, 0
      %p93 = por %p91, %p92
      %p94 = scmp.ne.s32.totalorder %s82, %s83
      %p95 = scmp.eq.s32.totalorder %s26, 1
      %p96 = por %p94, %p95
      %p98 = scmp.ne.s32.totalorder %s83, %s97
      %p99 = scmp.eq.s32.totalorder %s26, 0
      %p100 = por %p98, %p99
      %s102 = sadd.s32 %s101, 1
      %p105 = scmp.eq.s32.totalorder %s20, 1
      %p106 = scmp.ne.s32.totalorder %s101, %s103
      %p107 = scmp.eq.s32.totalorder %s20, 0
      %p108 = por %p106, %p107
      %p109 = scmp.ne.s32.totalorder %s101, %s103
      %p110 = scmp.eq.s32.totalorder %s25, 1
      %p111 = por %p109, %p110
      %p112 = scmp.ne.s32.totalorder %s103, %s104
      %p113 = scmp.eq.s32.totalorder %s25, 0
      %p114 = por %p112, %p113
      %p115 = scmp.ne.s32.totalorder %s103, %s104
      %p116 = scmp.eq.s32.totalorder %s26, 1
      %p117 = por %p115, %p116
      %p119 = scmp.ne.s32.totalorder %s104, %s118
      %p120 = scmp.eq.s32.totalorder %s26, 0
      %p121 = por %p119, %p120
      %s123 = sadd.s32 %s122, 1
      %p126 = scmp.eq.s32.totalorder %s20, 1
      %p127 = scmp.ne.s32.totalorder %s122, %s124
      %p128 = scmp.eq.s32.totalorder %s20, 0
      %p129 = por %p127, %p128
      %p130 = scmp.ne.s32.totalorder %s122, %s124
      %p131 = scmp.eq.s32.totalorder %s25, 1
      %p132 = por %p130, %p131
      %p133 = scmp.ne.s32.totalorder %s124, %s125
      %p134 = scmp.eq.s32.totalorder %s25, 0
      %p135 = por %p133, %p134
      %p136 = scmp.ne.s32.totalorder %s124, %s125
      %p137 = scmp.eq.s32.totalorder %s26, 1
      %p138 = por %p136, %p137
      %p140 = scmp.ne.s32.totalorder %s125, %s139
      %p141 = scmp.eq.s32.totalorder %s26, 0
      %p142 = por %p140, %p141
      %s143 = ssub.s32 %s20, %s27
      %p144 = scmp.eq.s32.totalorder %s143, 0
      %s146 = sadd.s32 %s145, 1
      %s147 = scalar_select %p144, %s145, %s146
      %p150 = pneg %p144
      %p151 = scmp.eq.s32.totalorder %s20, 1
      %p152 = por %p150, %p151
      %p153 = scmp.ne.s32.totalorder %s145, %s148
      %p154 = scmp.eq.s32.totalorder %s20, 0
      %p155 = por %p153, %p154
      %p156 = scmp.ne.s32.totalorder %s145, %s148
      %p157 = scmp.eq.s32.totalorder %s25, 1
      %p158 = por %p156, %p157
      %p159 = scmp.ne.s32.totalorder %s148, %s149
      %p160 = scmp.eq.s32.totalorder %s25, 0
      %p161 = por %p159, %p160
      %p162 = scmp.ne.s32.totalorder %s148, %s149
      %p163 = scmp.eq.s32.totalorder %s26, 1
      %p164 = por %p162, %p163
      %p166 = scmp.ne.s32.totalorder %s149, %s165
      %p167 = scmp.eq.s32.totalorder %s26, 0
      %p168 = por %p166, %p167
      %p169 = scmp.le.s32.totalorder 1, %s20
      %p170 = scmp.lt.s32.totalorder %s20, 3
      %p171 = pnand %p169, %p170
      %p172 = pneg %p171
      // Predicated region
      $region9: #{tpu_custom_call.1} parent=5 // pred_check
        _
      $region10: #{tpu_custom_call.1} parent=5 // pred_check_branch
        %174 = sbr.rel (%p171) target = $region12
      $region11: #{tpu_custom_call.1} parent=5 // pred_region
        %s175 = ssub.s32 %s20, 1
        // Predicated region
        $region13: #{tpu_custom_call.1} parent=11 // pred_check
          %p176 = pneg %p93
        $region14: #{tpu_custom_call.1} parent=11 // pred_check_branch
          %178 = sbr.rel (%p176) target = $region16
        $region15: #{tpu_custom_call.1} parent=11 // pred_region
          %s180 = ssub.s32 128, 128
          %181 = vsyncadd [#allocation6], %s180
          %s183 = sshll.u32 [#allocation7], 4
          %s184 = int_to_ptr.vmem [resolvable:$true] %s183
          %186 = dma.hbm_to_vmem [thread:$0]  %s2, 128, %s184, [#allocation6]
        $region16: #{tpu_custom_call.1} parent=11 // pred_fallthru
          _
        // Predicated region
        $region17: #{tpu_custom_call.1} parent=11 // pred_check
          %p187 = pneg %p114
        $region18: #{tpu_custom_call.1} parent=11 // pred_check_branch
          %189 = sbr.rel (%p187) target = $region20
        $region19: #{tpu_custom_call.1} parent=11 // pred_region
          _
        $region20: #{tpu_custom_call.1} parent=11 // pred_fallthru
          _
        // Predicated region
        $region21: #{tpu_custom_call.1} parent=11 // pred_check
          %p190 = pneg %p135
        $region22: #{tpu_custom_call.1} parent=11 // pred_check_branch
          %192 = sbr.rel (%p190) target = $region24
        $region23: #{tpu_custom_call.1} parent=11 // pred_region
          _
        $region24: #{tpu_custom_call.1} parent=11 // pred_fallthru
          _
      $region12: #{tpu_custom_call.1} parent=5 // pred_fallthru
        _
      %p193 = scmp.lt.s32.totalorder %s20, 2
      // Predicated region
      $region25: #{tpu_custom_call.1} parent=5 // pred_check
        %p194 = pneg %p193
      $region26: #{tpu_custom_call.1} parent=5 // pred_check_branch
        %196 = sbr.rel (%p194) target = $region28
      $region27: #{tpu_custom_call.1} parent=5 // pred_region
        // Predicated region
        $region29: #{tpu_custom_call.1} parent=27 // pred_check
          %p197 = pneg %p40
        $region30: #{tpu_custom_call.1} parent=27 // pred_check_branch
          %199 = sbr.rel (%p197) target = $region32
        $region31: #{tpu_custom_call.1} parent=27 // pred_region
          %s200 = sand.u32 %s30, 1
          %s201 = scalar_lea.sflag [#allocation3], %s200
          %s202 = sand.u32 %s30, 1
          %s203 = smul.addr %s202, 8
          %s204 = scalar_lea.vmem [#allocation2], %s203
          %s206 = ssub.s32 128, 128
          %207 = vsyncadd %s201, %s206
          %s208 = smul.addr %s20, 128
          %s209 = scalar_lea.hbm %s0, %s208
          %s211 = sshll.u32 %s204, 4
          %s212 = int_to_ptr.vmem [resolvable:$true] %s211
          %214 = dma.hbm_to_vmem [thread:$0]  %s209, 128, %s212, %s201
        $region32: #{tpu_custom_call.1} parent=27 // pred_fallthru
          _
        // Predicated region
        $region33: #{tpu_custom_call.1} parent=27 // pred_check
          %p215 = pneg %p66
        $region34: #{tpu_custom_call.1} parent=27 // pred_check_branch
          %217 = sbr.rel (%p215) target = $region36
        $region35: #{tpu_custom_call.1} parent=27 // pred_region
          %s218 = sand.u32 %s20, 1
          %s219 = scalar_lea.sflag [#allocation6], %s218
          %s220 = sand.u32 %s56, 1
          %s221 = smul.addr %s220, 8
          %s222 = scalar_lea.vmem [#allocation5], %s221
          %s224 = ssub.s32 128, 128
          %225 = vsyncadd %s219, %s224
          %s226 = smul.addr %s20, 128
          %s227 = scalar_lea.hbm %s1, %s226
          %s229 = sshll.u32 %s222, 4
          %s230 = int_to_ptr.vmem [resolvable:$true] %s229
          %232 = dma.hbm_to_vmem [thread:$0]  %s227, 128, %s230, %s219
        $region36: #{tpu_custom_call.1} parent=27 // pred_fallthru
          _
      $region28: #{tpu_custom_call.1} parent=5 // pred_fallthru
        _
      %p233 = scmp.le.s32.totalorder 1, %s20
      %p234 = scmp.lt.s32.totalorder %s20, 3
      %p235 = pnand %p233, %p234
      %p236 = pneg %p235
      // Predicated region
      $region37: #{tpu_custom_call.1} parent=5 // pred_check
        _
      $region38: #{tpu_custom_call.1} parent=5 // pred_check_branch
        %238 = sbr.rel (%p235) target = $region40
      $region39: #{tpu_custom_call.1} parent=5 // pred_region
        %s239 = ssub.s32 %s20, 1
        %s240 = sand.u32 %s33, 1
        %s241 = scalar_lea.sflag [#allocation3], %s240
        %s242 = sand.u32 %s33, 1
        %s243 = smul.addr %s242, 8
        %s244 = scalar_lea.vmem [#allocation2], %s243
        // Predicated region
        $region41: #{tpu_custom_call.1} parent=39 // pred_check
          %p245 = pneg %p46
        $region42: #{tpu_custom_call.1} parent=39 // pred_check_branch
          %247 = sbr.rel (%p245) target = $region44
        $region43: #{tpu_custom_call.1} parent=39 // pred_region
          %248 = dma.done %s241, 128
        $region44: #{tpu_custom_call.1} parent=39 // pred_fallthru
          _
        %s249 = sand.u32 %s25, 1
        %s250 = scalar_lea.sflag [#allocation6], %s249
        %s251 = sand.u32 %s59, 1
        %s252 = smul.addr %s251, 8
        %s253 = scalar_lea.vmem [#allocation5], %s252
        // Predicated region
        $region45: #{tpu_custom_call.1} parent=39 // pred_check
          %p254 = pneg %p72
        $region46: #{tpu_custom_call.1} parent=39 // pred_check_branch
          %256 = sbr.rel (%p254) target = $region48
        $region47: #{tpu_custom_call.1} parent=39 // pred_region
          %257 = dma.done %s250, 128
        $region48: #{tpu_custom_call.1} parent=39 // pred_fallthru
          _
        // Predicated region
        $region49: #{tpu_custom_call.1} parent=39 // pred_check
          %p258 = pneg %p93
        $region50: #{tpu_custom_call.1} parent=39 // pred_check_branch
          %260 = sbr.rel (%p258) target = $region52
        $region51: #{tpu_custom_call.1} parent=39 // pred_region
          %261 = dma.done [#allocation6], 128
        $region52: #{tpu_custom_call.1} parent=39 // pred_fallthru
          _
        %s262 = sand.u32 %s33, 1
        %s263 = scalar_lea.sflag [#allocation3], %s262
        %s264 = sand.u32 %s33, 1
        %s265 = smul.addr %s264, 8
        %s266 = scalar_lea.vmem [#allocation2], %s265
        %p267 = pneg %p46
        %p268 = pneg %p43
        %s269 = sand.u32 %s25, 1
        %s270 = scalar_lea.sflag [#allocation6], %s269
        %s271 = sand.u32 %s59, 1
        %s272 = smul.addr %s271, 8
        %s273 = scalar_lea.vmem [#allocation5], %s272
        %p274 = pneg %p72
        %p275 = pneg %p69
        %p276 = pneg %p93
        %p277 = pneg %p90
        %p278 = pneg %p114
        %p279 = pneg %p111
        %p280 = pneg %p135
        %p281 = pneg %p132
        %p282 = pneg %p161
        %p283 = pneg %p158
        %s284 = sand.u32 %s148, 1
        %s285 = scalar_lea.sflag [#allocation4], %s284
        %s286 = sand.u32 %s148, 1
        %s287 = smul.addr %s286, 4
        %s288 = scalar_lea.vmem [#allocation8], %s287
        %v289 = vld [vmem:[%s244] sm:$0xff]
        %v290 = vld [vmem:[%s253] sm:$0xff]
        %v291 = vadd.f32 %v289, %v290
        %v292 = vld [vmem:[#allocation7] sm:$0xff]
        %v293 = vadd.f32 %v291, %v292
        %vm294 = vcmask 261120
        %v295 = vsel %vm294, %v293, 0.0
        %296 = vadd.xlane.f32.xlu0 %v295
        %v297 = vpop.xlane.xlu0 %296
        %v298 = vrcp.pop 32.0
        %v299 = vmul.f32 %v297, %v298
        %v300 = vsub.f32 %v293, %v299
        %v301 = vmul.f32 %v300, %v300
        %v302 = vsel %vm294, %v301, 0.0
        %303 = vadd.xlane.f32.xlu0 %v302
        %v304 = vpop.xlane.xlu0 %303
        %v305 = vmul.f32 %v304, %v298
        %v306 = vadd.f32 %v305, 1e-12
        %v307 = vrsqrt.pop %v306
        %v308 = vmul.f32 %v300, %v307
        %v309 = vld [vmem:[%s3] sm:$0x1]
        %v311 = vlaneseq
        %v312 = vshrl.u32 %v311, 7
        %v313 = vsub.s32 0, %v312
        %v314 = vrot.slane %v309, %v313
        %v316 = vmul.f32 %v308, %v314
        %v317 = vld [vmem:[%s4] sm:$0x1]
        %v319 = vlaneseq
        %v320 = vshrl.u32 %v319, 7
        %v321 = vsub.s32 0, %v320
        %v322 = vrot.slane %v317, %v321
        %v324 = vadd.f32 %v316, %v322
        %v325 = vpack.c.bf16 %v324, %v324
        %vm326 = vcmask 257024
        %327 = vst.msk [vmem:[%s288] sm:$0xf] %vm326, %v325
        %s328 = sand.u32 %s148, 1
        %s329 = scalar_lea.sflag [#allocation4], %s328
        %s330 = sand.u32 %s148, 1
        %s331 = smul.addr %s330, 4
        %s332 = scalar_lea.vmem [#allocation8], %s331
        // Predicated region
        $region53: #{tpu_custom_call.1} parent=39 // pred_check
          %p333 = pneg %p158
        $region54: #{tpu_custom_call.1} parent=39 // pred_check_branch
          %335 = sbr.rel (%p333) target = $region56
        $region55: #{tpu_custom_call.1} parent=39 // pred_region
          %s337 = ssub.s32 64, 64
          %338 = vsyncadd %s329, %s337
          %s339 = smul.addr %s25, 64
          %s340 = scalar_lea.hbm %s5, %s339
          %s342 = sshll.u32 %s332, 4
          %s343 = int_to_ptr.vmem [resolvable:$true] %s342
          %345 = dma.vmem_to_hbm [thread:$0]  %s343, 64, %s340, %s329
        $region56: #{tpu_custom_call.1} parent=39 // pred_fallthru
          _
      $region40: #{tpu_custom_call.1} parent=5 // pred_fallthru
        _
      %p346 = scmp.le.s32.totalorder 2, %s20
      // Predicated region
      $region57: #{tpu_custom_call.1} parent=5 // pred_check
        %p347 = pneg %p346
      $region58: #{tpu_custom_call.1} parent=5 // pred_check_branch
        %349 = sbr.rel (%p347) target = $region60
      $region59: #{tpu_custom_call.1} parent=5 // pred_region
        %s350 = ssub.s32 %s20, 2
        // Predicated region
        $region61: #{tpu_custom_call.1} parent=59 // pred_check
          %p351 = pneg %p164
        $region62: #{tpu_custom_call.1} parent=59 // pred_check_branch
          %353 = sbr.rel (%p351) target = $region64
        $region63: #{tpu_custom_call.1} parent=59 // pred_region
          %s354 = sand.u32 %s149, 1
          %s355 = scalar_lea.sflag [#allocation4], %s354
          %s356 = sand.u32 %s149, 1
          %s357 = smul.addr %s356, 4
          %s358 = scalar_lea.vmem [#allocation8], %s357
          %359 = dma.done %s355, 64
        $region64: #{tpu_custom_call.1} parent=59 // pred_fallthru
          _
      $region60: #{tpu_custom_call.1} parent=5 // pred_fallthru
        _
    $region6: #{tpu_custom_call.1} parent=1 // loop_footer
      %s24 = sadd.s32 1, %s20
    $region7: #{tpu_custom_call.1} parent=1 // loop_footer_branch
      %19 = sbr.rel target = $region3
    $region8: #{tpu_custom_call.1} parent=1 // loop_exit
      _
    %360 = vsyncpa [#allocation3], 1
    %s361 = scalar_lea.sflag [#allocation3], 1
    %362 = vsyncpa %s361, 1
    %363 = vsyncpa [#allocation6], 1
    %s364 = scalar_lea.sflag [#allocation6], 1
    %365 = vsyncpa %s364, 1
    %366 = vsyncpa [#allocation4], 1
    %s367 = scalar_lea.sflag [#allocation4], 1
    %368 = vsyncpa %s367, 1

</llo_original>
